<compile_context>
chip_gen: v5e
topology: v5e:2x2
jax: 0.10.0
libtpu: 0.0.40
codegen_flags: <defaults>
</compile_context>

<pallas_src>
from typing import NamedTuple

import jax
import jax.numpy as jnp
from jax.experimental import pallas as pl
from jax.experimental.pallas import tpu as pltpu

_LANE = 128
_BF16_SUBLANE = 16  # packed bf16 vreg tile is (16, 128)


def _cdiv(a, b):
    return (a + b - 1) // b


def _round_up(v, m):
    return _cdiv(v, m) * m


def _pad_to(a, rows, cols):
    """Zero-pad a 2-D array to (rows, cols); no-op when already that size."""
    pr, pc = rows - a.shape[0], cols - a.shape[1]
    if pr == 0 and pc == 0:
        return a
    return jnp.pad(a, ((0, pr), (0, pc)))


def _vmem_budget_bytes():
    """Per-core VMEM budget with headroom for Mosaic internal scratch / spills."""
    try:
        cap = int(pltpu.get_tpu_info().vmem_capacity_bytes)
    except Exception:
        cap = 64 << 20  # conservative fallback == v7x per-TC physical size
    # ~56 MiB on v7x (64 MiB physical), ~112 MiB on v5e/v6e (128 MiB physical).
    return max(32 << 20, cap - max(8 << 20, cap // 8))


# ----------------------------------------------------------------------------- kernels
def _mlp_fused_kernel(x_ref, w1_ref, b1_ref, w2_ref, b2_ref, o_ref):
    """Both weights resident; fc1 intermediate never leaves registers."""
    h = jnp.dot(x_ref[...], w1_ref[...], preferred_element_type=jnp.float32)
    h = jnp.maximum(h + b1_ref[...], 0.0)
    y = jnp.dot(h.astype(jnp.bfloat16), w2_ref[...],
                preferred_element_type=jnp.float32)
    y = jnp.maximum(y + b2_ref[...], 0.0)
    o_ref[...] = y.astype(o_ref.dtype)


def _mlp_ntiled_kernel(x_ref, w1_ref, b1_ref, w2_ref, b2_ref, o_ref, h_ref):
    """W2 streamed in (Hp, tn) column tiles; h computed once per batch tile (j==0)
    and staged in bf16 VMEM scratch reused for every j."""
    @pl.when(pl.program_id(1) == 0)
    def _():
        h = jnp.dot(x_ref[...], w1_ref[...], preferred_element_type=jnp.float32)
        h = jnp.maximum(h + b1_ref[...], 0.0)
        h_ref[...] = h.astype(jnp.bfloat16)

    y = jnp.dot(h_ref[...], w2_ref[...], preferred_element_type=jnp.float32)
    y = jnp.maximum(y + b2_ref[...], 0.0)
    o_ref[...] = y.astype(o_ref.dtype)


# ----------------------------------------------------------------------------- params
class CombineParams(NamedTuple):
    w1: jax.Array   # (Dp, Hp) bf16, zero-padded fc1.weight^T
    b1: jax.Array   # (1, Hp)  f32
    w2: jax.Array   # (Hp, Hp) bf16, zero-padded fc2.weight^T
    b2: jax.Array   # (1, Hp)  f32
    d_in: int
    hidden: int


def prepare_combine_params(w1, b1, w2, b2):
    """Pad+cast the weights ONCE at init (hoisted out of the forward call).
    w1: [D_in, H] (= fc1.weight^T), b1: [H], w2: [H, H] (= fc2.weight^T), b2: [H]."""
    d_in, hidden = w1.shape
    dp, hp = _round_up(d_in, _LANE), _round_up(hidden, _LANE)
    w1p = _pad_to(w1.astype(jnp.bfloat16), dp, hp)
    w2p = _pad_to(w2.astype(jnp.bfloat16), hp, hp)
    b1p = _pad_to(b1.reshape(1, -1).astype(jnp.float32), 1, hp)
    b2p = _pad_to(b2.reshape(1, -1).astype(jnp.float32), 1, hp)
    return CombineParams(w1p, b1p, w2p, b2p, d_in, hidden)


# ----------------------------------------------------------------------------- plan
def _choose_block_n(block_b, dp, hp, out_isz, budget):
    """Largest 128-multiple column tile (dividing Hp) whose VMEM plan fits budget."""
    for tn in range(hp, _LANE - 1, -_LANE):
        if hp % tn:
            continue
        resident_w2 = hp * tn * 2 if tn == hp else 2 * hp * tn * 2   # resident vs streamed
        h_stage = 0 if tn == hp else block_b * hp * 2                # bf16 staging scratch
        need = (2 * block_b * dp * 2          # x tile, double-buffered bf16
                + dp * hp * 2                 # W1 resident bf16
                + resident_w2                 # W2
                + 2 * hp * 4 + 2 * tn * 4     # biases
                + 2 * block_b * tn * out_isz  # out tile, double-buffered
                + block_b * hp * 4            # f32 h working set
                + h_stage
                + block_b * tn * 4)           # f32 y working set
        if need <= budget:
            return tn
    return _LANE  # best effort


# ----------------------------------------------------------------------------- forward
def combine_module_forward(x, params: CombineParams, *, block_b=None, block_n=None,
                           out_dtype=None):
    """x: [B, D_in] -> [B, H] = relu(relu(x @ W1 + b1) @ W2 + b2)."""
    B, d_in = x.shape
    assert d_in == params.d_in, "input feature dim mismatch"
    H = params.hidden
    dp, hp = params.w1.shape
    out_dtype = out_dtype or x.dtype
    out_isz = jnp.dtype(out_dtype).itemsize
    budget = _vmem_budget_bytes()

    # Batch tiling: multiple of 16 rows (bf16 sublane packing), capped so realistic
    # batches give >= ~4 grid steps (megacore on v7x + pipelining overlap).
    if block_b is None:
        block_b = max(_BF16_SUBLANE, min(256, _round_up(_cdiv(B, 4), _BF16_SUBLANE)))
    block_b = _round_up(block_b, _BF16_SUBLANE)
    Bp = _round_up(B, block_b)

    # Output-column tiling (only kicks in when resident W2 would blow the VMEM budget).
    if block_n is None:
        block_n = _choose_block_n(block_b, dp, hp, out_isz, budget)
    block_n = min(_round_up(block_n, _LANE), hp)
    while hp % block_n:
        block_n -= _LANE

    # Pad / cast x only when actually required.
    xb = x if x.dtype == jnp.bfloat16 else x.astype(jnp.bfloat16)
    xb = _pad_to(xb, Bp, dp)

    grid_b = Bp // block_b
    resident = lambda shape: pl.BlockSpec(shape, None, pipeline_mode=pl.Buffered(1))

    if block_n == hp:
        # Fused path: everything resident, no h staging.
        kernel = _mlp_fused_kernel
        grid = (grid_b,)
        in_specs = [
            pl.BlockSpec((block_b, dp), lambda i: (i, 0)),                       # x tile
            pl.BlockSpec((dp, hp), lambda i: (0, 0), pipeline_mode=pl.Buffered(1)),   # W1
            pl.BlockSpec((1, hp), lambda i: (0, 0), pipeline_mode=pl.Buffered(1)),    # b1
            pl.BlockSpec((hp, hp), lambda i: (0, 0), pipeline_mode=pl.Buffered(1)),   # W2
            pl.BlockSpec((1, hp), lambda i: (0, 0), pipeline_mode=pl.Buffered(1)),    # b2
        ]
        out_specs = pl.BlockSpec((block_b, hp), lambda i: (i, 0))
        scratch = ()
        dim_sem = ("parallel",)
    else:
        # N-tiled path: stream W2 column tiles (double-buffered), stage h once per i.
        kernel = _mlp_ntiled_kernel
        grid = (grid_b, hp // block_n)
        in_specs = [
            pl.BlockSpec((block_b, dp), lambda i, j: (i, 0)),                          # x
            pl.BlockSpec((dp, hp), lambda i, j: (0, 0), pipeline_mode=pl.Buffered(1)), # W1
            pl.BlockSpec((1, hp), lambda i, j: (0, 0), pipeline_mode=pl.Buffered(1)),  # b1
            pl.BlockSpec((hp, block_n), lambda i, j: (0, j)),                          # W2 tile
            pl.BlockSpec((1, block_n), lambda i, j: (0, j)),                           # b2 tile
        ]
        out_specs = pl.BlockSpec((block_b, block_n), lambda i, j: (i, j))
        scratch = (pltpu.VMEM((block_b, hp), jnp.bfloat16),)   # bf16 h staging
        dim_sem = ("parallel", "arbitrary")

    flops = 2 * Bp * (dp * hp + hp * hp)
    bytes_accessed = int(xb.size * 2 + params.w1.size * 2 + params.w2.size * 2
                         + params.b1.size * 4 + params.b2.size * 4
                         + Bp * hp * out_isz)

    out_padded = pl.pallas_call(
        kernel,
        out_shape=jax.ShapeDtypeStruct((Bp, hp), out_dtype),
        grid_spec=pltpu.PrefetchScalarGridSpec(
            num_scalar_prefetch=0,
            grid=grid,
            in_specs=in_specs,
            out_specs=out_specs,
            scratch_shapes=scratch,
        ),
        compiler_params=pltpu.CompilerParams(
            dimension_semantics=dim_sem,
            vmem_limit_bytes=budget,
        ),
        cost_estimate=pl.CostEstimate(
            flops=flops, transcendentals=0, bytes_accessed=bytes_accessed),
    )(xb, params.w1, params.b1, params.w2, params.b2)

    return out_padded[:B, :H]


# ----------------------------------------------------------------------------- references
def _reference_bf16(x, w1, b1, w2, b2):
    """Same precision path as the kernel (bf16 matmuls, f32 accumulation)."""
    h = jnp.dot(x.astype(jnp.bfloat16), w1.astype(jnp.bfloat16),
                preferred_element_type=jnp.float32) + b1
    h = jnp.maximum(h, 0.0)
    y = jnp.dot(h.astype(jnp.bfloat16), w2.astype(jnp.bfloat16),
                preferred_element_type=jnp.float32) + b2
    return jnp.maximum(y, 0.0)


def _reference_f32(x, w1, b1, w2, b2):
    h = jnp.maximum(x @ w1 + b1, 0.0)
    return jnp.maximum(h @ w2 + b2, 0.0)


# ----------------------------------------------------------------------------- demo
if __name__ == "__main__":
    key = jax.random.PRNGKey(0)

    def init_params(k, d_in, hidden):
        k1, k2, k3, k4 = jax.random.split(k, 4)
        bound1 = 1.0 / (d_in ** 0.5)
        w1 = jax.random.uniform(k1, (d_in, hidden), minval=-bound1, maxval=bound1,
                                dtype=jnp.float32)   # fc1.weight^T
        b1 = jax.random.uniform(k2, (hidden,), minval=-bound1, maxval=bound1,
                                dtype=jnp.float32)
        bound2 = 1.0 / (hidden ** 0.5)
        w2 = jax.random.uniform(k3, (hidden, hidden), minval=-bound2, maxval=bound2,
                                dtype=jnp.float32)   # fc2.weight^T
        b2 = jax.random.uniform(k4, (hidden,), minval=-bound2, maxval=bound2,
                                dtype=jnp.float32)
        return w1, b1, w2, b2

    k_x, k_p, k_x2, k_p2 = jax.random.split(key, 4)

    # --- Test 1: module defaults (input_dim=16, hidden_dim=32) -> fused path.
    B, D_IN, H = 8, 16, 32
    x = jax.random.normal(k_x, (B, D_IN), dtype=jnp.float32)
    w1, b1, w2, b2 = init_params(k_p, D_IN, H)
    params = prepare_combine_params(w1, b1, w2, b2)      # hoisted pad/cast (once)
    out = jax.block_until_ready(combine_module_forward(x, params))
    assert out.shape == (B, H) and out.dtype == x.dtype
    assert jnp.allclose(out, _reference_bf16(x, w1, b1, w2, b2), atol=1e-4, rtol=1e-4), \
        "fused path mismatch vs bf16 reference"
    assert jnp.allclose(out, _reference_f32(x, w1, b1, w2, b2), atol=1e-1, rtol=1e-1), \
        "fused path mismatch vs f32 reference"

    # --- Test 2: larger hidden dim with forced column tiling (N-tiled / large-H path).
    B2, D2, H2 = 8, 16, 256
    x2 = jax.random.normal(k_x2, (B2, D2), dtype=jnp.float32)
    w1b, b1b, w2b, b2b = init_params(k_p2, D2, H2)
    params2 = prepare_combine_params(w1b, b1b, w2b, b2b)
    out2 = jax.block_until_ready(combine_module_forward(x2, params2, block_n=128))
    assert out2.shape == (B2, H2)
    assert jnp.allclose(out2, _reference_bf16(x2, w1b, b1b, w2b, b2b), atol=1e-4, rtol=1e-4), \
        "N-tiled path mismatch vs bf16 reference"
    assert jnp.allclose(out2, _reference_f32(x2, w1b, b1b, w2b, b2b), atol=1e-1, rtol=1e-1), \
        "N-tiled path mismatch vs f32 reference"

    print("KERNEL_OK")
</pallas_src>

<mosaic_0001>
module attributes {stable_mosaic.version = 11 : i64} {
  func.func @_mlp_fused_kernel(%arg0: i32, %arg1: memref<16x128xbf16, #tpu.memory_space<vmem>>, %arg2: memref<128x128xbf16, #tpu.memory_space<vmem>>, %arg3: memref<1x128xf32, #tpu.memory_space<vmem>>, %arg4: memref<128x128xbf16, #tpu.memory_space<vmem>>, %arg5: memref<1x128xf32, #tpu.memory_space<vmem>>, %arg6: memref<16x128xf32, #tpu.memory_space<vmem>>) attributes {dimension_semantics = [#tpu.dimension_semantics<parallel>], iteration_bounds = array<i64: 1>, scalar_prefetch = 0 : i64, scratch_operands = 0 : i64, tpu.core_type = #tpu.core_type<tc>, window_params = [{transform_indices = @transform_0, window_bounds = array<i64: 16, 128>}, {pipeline_mode = #tpu.pipeline_mode<synchronous>, transform_indices = @transform_1, window_bounds = array<i64: 128, 128>}, {pipeline_mode = #tpu.pipeline_mode<synchronous>, transform_indices = @transform_2, window_bounds = array<i64: 1, 128>}, {pipeline_mode = #tpu.pipeline_mode<synchronous>, transform_indices = @transform_3, window_bounds = array<i64: 128, 128>}, {pipeline_mode = #tpu.pipeline_mode<synchronous>, transform_indices = @transform_4, window_bounds = array<i64: 1, 128>}, {transform_indices = @transform_5, window_bounds = array<i64: 16, 128>}]} {
    %c0 = arith.constant 0 : index
    %c0_0 = arith.constant 0 : index
    %0 = vector.load %arg1[%c0, %c0_0] : memref<16x128xbf16, #tpu.memory_space<vmem>>, vector<16x128xbf16>
    %c0_1 = arith.constant 0 : index
    %c0_2 = arith.constant 0 : index
    %1 = vector.load %arg2[%c0_1, %c0_2] : memref<128x128xbf16, #tpu.memory_space<vmem>>, vector<128x128xbf16>
    %cst = arith.constant dense<0.000000e+00> : vector<16x128xf32>
    %2 = tpu.matmul %0, %1, %cst {dimension_numbers = #tpu.dot_dimension_numbers<[1], [0], [0], [1], [0, 0, 1, 1], [], []>} : vector<16x128xbf16>, vector<128x128xbf16>, vector<16x128xf32> -> vector<16x128xf32>
    %c0_3 = arith.constant 0 : index
    %c0_4 = arith.constant 0 : index
    %3 = vector.load %arg3[%c0_3, %c0_4] : memref<1x128xf32, #tpu.memory_space<vmem>>, vector<1x128xf32>
    %4 = vector.broadcast %3 : vector<1x128xf32> to vector<16x128xf32>
    %5 = arith.addf %2, %4 : vector<16x128xf32>
    %cst_5 = arith.constant 0.000000e+00 : f32
    %6 = vector.broadcast %cst_5 : f32 to vector<16x128xf32>
    %7 = arith.maximumf %5, %6 : vector<16x128xf32>
    %8 = arith.truncf %7 : vector<16x128xf32> to vector<16x128xbf16>
    %c0_6 = arith.constant 0 : index
    %c0_7 = arith.constant 0 : index
    %9 = vector.load %arg4[%c0_6, %c0_7] : memref<128x128xbf16, #tpu.memory_space<vmem>>, vector<128x128xbf16>
    %cst_8 = arith.constant dense<0.000000e+00> : vector<16x128xf32>
    %10 = tpu.matmul %8, %9, %cst_8 {dimension_numbers = #tpu.dot_dimension_numbers<[1], [0], [0], [1], [0, 0, 1, 1], [], []>} : vector<16x128xbf16>, vector<128x128xbf16>, vector<16x128xf32> -> vector<16x128xf32>
    %c0_9 = arith.constant 0 : index
    %c0_10 = arith.constant 0 : index
    %11 = vector.load %arg5[%c0_9, %c0_10] : memref<1x128xf32, #tpu.memory_space<vmem>>, vector<1x128xf32>
    %12 = vector.broadcast %11 : vector<1x128xf32> to vector<16x128xf32>
    %13 = arith.addf %10, %12 : vector<16x128xf32>
    %cst_11 = arith.constant 0.000000e+00 : f32
    %14 = vector.broadcast %cst_11 : f32 to vector<16x128xf32>
    %15 = arith.maximumf %13, %14 : vector<16x128xf32>
    %c0_12 = arith.constant 0 : index
    %c0_13 = arith.constant 0 : index
    %16 = vector.load %arg6[%c0_12, %c0_13] : memref<16x128xf32, #tpu.memory_space<vmem>>, vector<16x128xf32>
    tpu.vector_store %arg6[%c0_12, %c0_13], %15 {strides = array<i32>} : memref<16x128xf32, #tpu.memory_space<vmem>>, vector<16x128xf32>,
    return
  }
  func.func @transform_0(%arg0: i32) -> (i32, i32) {
    %c0_i32 = arith.constant 0 : i32
    %c0_i32_0 = arith.constant 0 : i32
    return %arg0, %c0_i32 : i32, i32
  }
  func.func @transform_1(%arg0: i32) -> (i32, i32) {
    %c0_i32 = arith.constant 0 : i32
    %c0_i32_0 = arith.constant 0 : i32
    %c0_i32_1 = arith.constant 0 : i32
    return %c0_i32, %c0_i32_0 : i32, i32
  }
  func.func @transform_2(%arg0: i32) -> (i32, i32) {
    %c0_i32 = arith.constant 0 : i32
    %c0_i32_0 = arith.constant 0 : i32
    %c0_i32_1 = arith.constant 0 : i32
    return %c0_i32, %c0_i32_0 : i32, i32
  }
  func.func @transform_3(%arg0: i32) -> (i32, i32) {
    %c0_i32 = arith.constant 0 : i32
    %c0_i32_0 = arith.constant 0 : i32
    %c0_i32_1 = arith.constant 0 : i32
    return %c0_i32, %c0_i32_0 : i32, i32
  }
  func.func @transform_4(%arg0: i32) -> (i32, i32) {
    %c0_i32 = arith.constant 0 : i32
    %c0_i32_0 = arith.constant 0 : i32
    %c0_i32_1 = arith.constant 0 : i32
    return %c0_i32, %c0_i32_0 : i32, i32
  }
  func.func @transform_5(%arg0: i32) -> (i32, i32) {
    %c0_i32 = arith.constant 0 : i32
    %c0_i32_0 = arith.constant 0 : i32
    return %arg0, %c0_i32 : i32, i32
  }
}

</mosaic_0001>

<llo_original>
// kernel: tpu_custom_call.1
$region0: #{tpu_custom_call.1}
  #allocation0 [shape = 'u32[]', space=smem, size = 0x4, offset = 0x4, fixed_abs, tag = 'smem constant byte address 0x4 - core index']
  #allocation1 [shape = 'u32[72,128]{1,0:T(1,128)}', space=vmem, size = 0x9000, scoped, tag = 'internal scratch']
  %s0 = inlined_call_operand.hbm [shape: bf16[16,128], index: 0, kind: input, shape index: {}]
  %s1 = inlined_call_operand.hbm [shape: bf16[128,128], index: 1, kind: input, shape index: {}]
  %s2 = inlined_call_operand.vmem [shape: f32[1,128], index: 2, kind: input, shape index: {}]
  %s3 = inlined_call_operand.hbm [shape: bf16[128,128], index: 3, kind: input, shape index: {}]
  %s4 = inlined_call_operand.vmem [shape: f32[1,128], index: 4, kind: input, shape index: {}]
  %s5 = inlined_call_operand.hbm [shape: f32[16,128], index: 5, kind: output, shape index: {}]
  %s6 = sld [smem:[#allocation0]]
  $region42: #{tpu_custom_call.1} parent=0
    _
  %s8 = ssub.s32 1, %s6
  %s9 = scalar_select 0, %s8, %s6
  $region1: #{tpu_custom_call.1} parent=0
    #allocation2 [shape = 'u8[4096]{0}', space=vmem, size = 0x1000, scoped, tag = 'input window, operand 0, single buffered']
    #allocation3 [shape = 's32[1]{0}', space=sflag, size = 0x4, scoped, tag = 'scoped memory for tpu_custom_call.1']
    #allocation4 [shape = 's32[1]{0}', space=sflag, size = 0x4, scoped, tag = 'scoped memory for tpu_custom_call.1']
    #allocation5 [shape = 'u8[32768]{0}', space=vmem, size = 0x8000, scoped, tag = 'input window, operand 1, single buffered']
    #allocation6 [shape = 's32[1]{0}', space=sflag, size = 0x4, scoped, tag = 'scoped memory for tpu_custom_call.1']
    #allocation7 [shape = 'u8[32768]{0}', space=vmem, size = 0x8000, scoped, tag = 'input window, operand 3, single buffered']
    #allocation8 [shape = 'u8[8192]{0}', space=vmem, size = 0x2000, scoped, tag = 'output window, operand 0, single buffered']
    %10 = vsyncpa [#allocation3], 0
    %11 = vsyncpa [#allocation6], 0
    %12 = vsyncpa [#allocation4], 0
    // Predicated region
    $region2: #{tpu_custom_call.1} parent=1 // pred_check
      _
    $region3: #{tpu_custom_call.1} parent=1 // pred_check_branch
      %14 = sbr.rel (0) target = $region5
    $region4: #{tpu_custom_call.1} parent=1 // pred_region
      %16 = vsyncadd [#allocation3], 0
      %s17 = sshll.u32 %s0, 4
      %s18 = int_to_ptr.hbm [resolvable:$true] %s17
      %s19 = sshll.u32 [#allocation2], 4
      %s20 = int_to_ptr.vmem [resolvable:$true] %s19
      %25 = dma.hbm_to_vmem [thread:$0]  %s18, 128, %s20, [#allocation3], 64, 64, 4
    $region5: #{tpu_custom_call.1} parent=1 // pred_fallthru
      _
    // Predicated region
    $region6: #{tpu_custom_call.1} parent=1 // pred_check
      _
    $region7: #{tpu_custom_call.1} parent=1 // pred_check_branch
      %27 = sbr.rel (0) target = $region9
    $region8: #{tpu_custom_call.1} parent=1 // pred_region
      %29 = vsyncadd [#allocation6], 0
      %s30 = sshll.u32 %s1, 4
      %s31 = int_to_ptr.hbm [resolvable:$true] %s30
      %s32 = sshll.u32 [#allocation5], 4
      %s33 = int_to_ptr.vmem [resolvable:$true] %s32
      %38 = dma.hbm_to_vmem [thread:$0]  %s31, 1024, %s33, [#allocation6], 64, 64, 4
    $region9: #{tpu_custom_call.1} parent=1 // pred_fallthru
      _
    // Predicated region
    $region10: #{tpu_custom_call.1} parent=1 // pred_check
      _
    $region11: #{tpu_custom_call.1} parent=1 // pred_check_branch
      %40 = sbr.rel (0) target = $region13
    $region12: #{tpu_custom_call.1} parent=1 // pred_region
      _
    $region13: #{tpu_custom_call.1} parent=1 // pred_fallthru
      _
    // Predicated region
    $region14: #{tpu_custom_call.1} parent=1 // pred_check
      _
    $region15: #{tpu_custom_call.1} parent=1 // pred_check_branch
      %42 = sbr.rel (0) target = $region17
    $region16: #{tpu_custom_call.1} parent=1 // pred_region
      %44 = vsyncadd [#allocation6], 0
      %s45 = sshll.u32 %s3, 4
      %s46 = int_to_ptr.hbm [resolvable:$true] %s45
      %s47 = sshll.u32 [#allocation7], 4
      %s48 = int_to_ptr.vmem [resolvable:$true] %s47
      %53 = dma.hbm_to_vmem [thread:$0]  %s46, 1024, %s48, [#allocation6], 64, 64, 4
    $region17: #{tpu_custom_call.1} parent=1 // pred_fallthru
      _
    // Predicated region
    $region18: #{tpu_custom_call.1} parent=1 // pred_check
      _
    $region19: #{tpu_custom_call.1} parent=1 // pred_check_branch
      %55 = sbr.rel (0) target = $region21
    $region20: #{tpu_custom_call.1} parent=1 // pred_region
      _
    $region21: #{tpu_custom_call.1} parent=1 // pred_fallthru
      _
    // Predicated region
    $region22: #{tpu_custom_call.1} parent=1 // pred_check
      _
    $region23: #{tpu_custom_call.1} parent=1 // pred_check_branch
      %57 = sbr.rel (0) target = $region25
    $region24: #{tpu_custom_call.1} parent=1 // pred_region
      %59 = dma.done [#allocation3], 128
    $region25: #{tpu_custom_call.1} parent=1 // pred_fallthru
      _
    // Predicated region
    $region26: #{tpu_custom_call.1} parent=1 // pred_check
      _
    $region27: #{tpu_custom_call.1} parent=1 // pred_check_branch
      %61 = sbr.rel (0) target = $region29
    $region28: #{tpu_custom_call.1} parent=1 // pred_region
      %63 = dma.done [#allocation6], 1024
    $region29: #{tpu_custom_call.1} parent=1 // pred_fallthru
      _
    // Predicated region
    $region30: #{tpu_custom_call.1} parent=1 // pred_check
      _
    $region31: #{tpu_custom_call.1} parent=1 // pred_check_branch
      %65 = sbr.rel (0) target = $region33
    $region32: #{tpu_custom_call.1} parent=1 // pred_region
      %67 = dma.done [#allocation6], 1024
    $region33: #{tpu_custom_call.1} parent=1 // pred_fallthru
      _
    %v68 = vld [vmem:[#allocation2] sm:$0xf]
    %v69 = vld [vmem:[#allocation2 + $0x4] sm:$0xf]
    %v70 = vld [vmem:[#allocation5] sm:$0xf]
    %v71 = vld [vmem:[#allocation5 + $0x4] sm:$0xf]
    %v72 = vld [vmem:[#allocation5 + $0x8] sm:$0xf]
    %v73 = vld [vmem:[#allocation5 + $0xc] sm:$0xf]
    %v74 = vld [vmem:[#allocation5 + $0x10] sm:$0xf]
    %v75 = vld [vmem:[#allocation5 + $0x14] sm:$0xf]
    %v76 = vld [vmem:[#allocation5 + $0x18] sm:$0xf]
    %v77 = vld [vmem:[#allocation5 + $0x1c] sm:$0xf]
    %v78 = vld [vmem:[#allocation5 + $0x20] sm:$0xf]
    %v79 = vld [vmem:[#allocation5 + $0x24] sm:$0xf]
    %v80 = vld [vmem:[#allocation5 + $0x28] sm:$0xf]
    %v81 = vld [vmem:[#allocation5 + $0x2c] sm:$0xf]
    %v82 = vld [vmem:[#allocation5 + $0x30] sm:$0xf]
    %v83 = vld [vmem:[#allocation5 + $0x34] sm:$0xf]
    %v84 = vld [vmem:[#allocation5 + $0x38] sm:$0xf]
    %v85 = vld [vmem:[#allocation5 + $0x3c] sm:$0xf]
    %v86 = vld [vmem:[%s2] sm:$0x1]
    %v88 = vperm.slane %v86, 0
    %v92 = vunpack.c.l.b16 %v68
    %v93 = vunpack.c.l.b16 %v69
    %v94 = vpack.c.b16 %v93, %v92
    %v112 = vunpack.c.l.b16 %v70
    %v113 = vunpack.c.l.b16 %v71
    %v114 = vunpack.c.l.b16 %v72
    %v115 = vunpack.c.l.b16 %v73
    %v116 = vunpack.c.l.b16 %v74
    %v117 = vunpack.c.l.b16 %v75
    %v118 = vunpack.c.l.b16 %v76
    %v119 = vunpack.c.l.b16 %v77
    %v120 = vunpack.c.l.b16 %v78
    %v121 = vunpack.c.l.b16 %v79
    %v122 = vunpack.c.l.b16 %v80
    %v123 = vunpack.c.l.b16 %v81
    %v124 = vunpack.c.l.b16 %v82
    %v125 = vunpack.c.l.b16 %v83
    %v126 = vunpack.c.l.b16 %v84
    %v127 = vunpack.c.l.b16 %v85
    %v128 = vpack.c.b16 %v113, %v112
    %v129 = vpack.c.b16 %v115, %v114
    %v130 = vpack.c.b16 %v117, %v116
    %v131 = vpack.c.b16 %v119, %v118
    %v132 = vpack.c.b16 %v121, %v120
    %v133 = vpack.c.b16 %v123, %v122
    %v134 = vpack.c.b16 %v125, %v124
    %v135 = vpack.c.b16 %v127, %v126
    %144 = vmatpush.bf16.msra.mxu0 %v135
    %145 = vmatpush.bf16.msra.mxu0 %v134
    %146 = vmatpush.bf16.msra.mxu0 %v133
    %147 = vmatpush.bf16.msra.mxu0 %v132
    %148 = vmatpush.bf16.msra.mxu0 %v131
    %149 = vmatpush.bf16.msra.mxu0 %v130
    %150 = vmatpush.bf16.msra.mxu0 %v129
    %151 = vmatpush.bf16.msra.mxu0 %v128
    %152 = vmatmul.bf16.gmra.mxu0 %v94
    %v153 = vpop.f32.mrf.mxu0
    %v154 = vadd.f32 %v88, %v153
    %v155 = vpop.f32.mrf.mxu0
    %v156 = vadd.f32 %v88, %v155
    %157 = vdwg.mxu0
    %v158 = vmax.f32 %v154, 0.0
    %v159 = vmax.f32 %v156, 0.0
    %v160 = vpack.c.bf16 %v159, %v158
    %v161 = vld [vmem:[#allocation7] sm:$0xf]
    %v162 = vld [vmem:[#allocation7 + $0x4] sm:$0xf]
    %v163 = vld [vmem:[#allocation7 + $0x8] sm:$0xf]
    %v164 = vld [vmem:[#allocation7 + $0xc] sm:$0xf]
    %v165 = vld [vmem:[#allocation7 + $0x10] sm:$0xf]
    %v166 = vld [vmem:[#allocation7 + $0x14] sm:$0xf]
    %v167 = vld [vmem:[#allocation7 + $0x18] sm:$0xf]
    %v168 = vld [vmem:[#allocation7 + $0x1c] sm:$0xf]
    %v169 = vld [vmem:[#allocation7 + $0x20] sm:$0xf]
    %v170 = vld [vmem:[#allocation7 + $0x24] sm:$0xf]
    %v171 = vld [vmem:[#allocation7 + $0x28] sm:$0xf]
    %v172 = vld [vmem:[#allocation7 + $0x2c] sm:$0xf]
    %v173 = vld [vmem:[#allocation7 + $0x30] sm:$0xf]
    %v174 = vld [vmem:[#allocation7 + $0x34] sm:$0xf]
    %v175 = vld [vmem:[#allocation7 + $0x38] sm:$0xf]
    %v176 = vld [vmem:[#allocation7 + $0x3c] sm:$0xf]
    %v177 = vld [vmem:[%s4] sm:$0x1]
    %v179 = vperm.slane %v177, 0
    %v197 = vunpack.c.l.b16 %v161
    %v198 = vunpack.c.l.b16 %v162
    %v199 = vunpack.c.l.b16 %v163
    %v200 = vunpack.c.l.b16 %v164
    %v201 = vunpack.c.l.b16 %v165
    %v202 = vunpack.c.l.b16 %v166
    %v203 = vunpack.c.l.b16 %v167
    %v204 = vunpack.c.l.b16 %v168
    %v205 = vunpack.c.l.b16 %v169
    %v206 = vunpack.c.l.b16 %v170
    %v207 = vunpack.c.l.b16 %v171
    %v208 = vunpack.c.l.b16 %v172
    %v209 = vunpack.c.l.b16 %v173
    %v210 = vunpack.c.l.b16 %v174
    %v211 = vunpack.c.l.b16 %v175
    %v212 = vunpack.c.l.b16 %v176
    %v213 = vpack.c.b16 %v198, %v197
    %v214 = vpack.c.b16 %v200, %v199
    %v215 = vpack.c.b16 %v202, %v201
    %v216 = vpack.c.b16 %v204, %v203
    %v217 = vpack.c.b16 %v206, %v205
    %v218 = vpack.c.b16 %v208, %v207
    %v219 = vpack.c.b16 %v210, %v209
    %v220 = vpack.c.b16 %v212, %v211
    %229 = vmatpush.bf16.msra.mxu0 %v220
    %230 = vmatpush.bf16.msra.mxu0 %v219
    %231 = vmatpush.bf16.msra.mxu0 %v218
    %232 = vmatpush.bf16.msra.mxu0 %v217
    %233 = vmatpush.bf16.msra.mxu0 %v216
    %234 = vmatpush.bf16.msra.mxu0 %v215
    %235 = vmatpush.bf16.msra.mxu0 %v214
    %236 = vmatpush.bf16.msra.mxu0 %v213
    %237 = vmatmul.bf16.gmra.mxu0 %v160
    %v238 = vpop.f32.mrf.mxu0
    %v239 = vadd.f32 %v179, %v238
    %v240 = vpop.f32.mrf.mxu0
    %v241 = vadd.f32 %v179, %v240
    %242 = vdwg.mxu0
    %v243 = vmax.f32 %v239, 0.0
    %v244 = vmax.f32 %v241, 0.0
    %245 = vst [vmem:[#allocation8] sm:$0xff] %v243
    %246 = vst [vmem:[#allocation8 + $0x8] sm:$0xff] %v244
    // Predicated region
    $region34: #{tpu_custom_call.1} parent=1 // pred_check
      _
    $region35: #{tpu_custom_call.1} parent=1 // pred_check_branch
      %248 = sbr.rel (0) target = $region37
    $region36: #{tpu_custom_call.1} parent=1 // pred_region
      %250 = vsyncadd [#allocation4], 0
      %s251 = sshll.u32 [#allocation8], 4
      %s252 = int_to_ptr.vmem [resolvable:$true] %s251
      %s253 = sshll.u32 %s5, 4
      %s254 = int_to_ptr.hbm [resolvable:$true] %s253
      %259 = dma.vmem_to_hbm [thread:$0]  %s252, 256, %s254, [#allocation4], 128, 128, 8
    $region37: #{tpu_custom_call.1} parent=1 // pred_fallthru
      _
    // Predicated region
    $region38: #{tpu_custom_call.1} parent=1 // pred_check
      _
    $region39: #{tpu_custom_call.1} parent=1 // pred_check_branch
      %261 = sbr.rel (0) target = $region41
    $region40: #{tpu_custom_call.1} parent=1 // pred_region
      %263 = dma.done [#allocation4], 256
    $region41: #{tpu_custom_call.1} parent=1 // pred_fallthru
      _
    %264 = vsyncpa [#allocation3], 1
    %265 = vsyncpa [#allocation6], 1
    %266 = vsyncpa [#allocation4], 1

</llo_original>
